<compile_context>
chip_gen: v7x
topology: tpu7x:2x2x1
jax: 0.10.0
libtpu: 0.0.40
codegen_flags: <defaults>
</compile_context>

<pallas_src>
import functools

import jax
import jax.numpy as jnp
from jax.experimental import pallas as pl
from jax.experimental.pallas import tpu as pltpu

EPSILON = 1e-40  # PyTorch module's clamp floor (subnormal in f32).
# Effective floor: TPUs flush f32 denormals, so use the smallest normal f32.
CLAMP_LO = max(EPSILON, 1.1754944e-38)

LANES = 128
MAX_BLOCK_ROWS = 4096  # 4096 x 128 f32 = 2 MiB per input block.


def _round_up(x, m):
    return ((x + m - 1) // m) * m


def _gloss_kernel(x_ref, o_ref, acc_ref, *, total_rows, block_rows, apply_mask):
    c = pl.program_id(0)        # partial-sum index ("parallel" axis, v7x TCs)
    i = pl.program_id(1)        # reduction step ("arbitrary" axis)
    inner = pl.num_programs(1)

    @pl.when(i == 0)
    def _():
        acc_ref[...] = jnp.zeros_like(acc_ref)

    x = x_ref[...].astype(jnp.float32)
    if apply_mask:
        # Rows past the real data (ragged last block / duplicated clamped
        # block) are forced to 1.0 so they contribute -log(1) = 0.
        start_row = (c * inner + i) * block_rows
        row_ids = jax.lax.broadcasted_iota(jnp.int32, x.shape, 0) + start_row
        x = jnp.where(row_ids < total_rows, x, 1.0)

    x = jnp.clip(x, CLAMP_LO, 1.0)
    acc_ref[...] += -jnp.log(x)  # element-wise only; no per-step reduce

    @pl.when(i == inner - 1)
    def _():
        o_ref[...] = jnp.broadcast_to(jnp.sum(acc_ref[...]), (1, 1))


def g_loss(logits_gen):
    """Pallas implementation of GLoss.forward. Returns a scalar float32."""
    n = logits_gen.size
    dtype = logits_gen.dtype
    itemsize = jnp.dtype(dtype).itemsize

    flat = logits_gen.reshape(-1)  # native dtype; kernel upcasts per block

    # Lane-dense 2D view; reshape is copy-free when size % 128 == 0.  Only in
    # the rare ragged case pad the tail with 1.0 (-log(1) = 0).
    rem = flat.shape[0] % LANES
    if rem:
        flat = jnp.concatenate(
            [flat, jnp.ones((LANES - rem,), dtype)]
        )
    rows = flat.shape[0] // LANES
    x2d = flat.reshape(rows, LANES)

    # Sublane-aligned row block for the input dtype (f32:8, bf16:16, int8:32).
    sub = {4: 8, 2: 16, 1: 32}.get(itemsize, 8)
    block_rows = min(MAX_BLOCK_ROWS, _round_up(rows, sub))

    num_blocks = pl.cdiv(rows, block_rows)
    num_splits = 2 if num_blocks >= 2 else 1  # one partial per v7x TensorCore
    inner = pl.cdiv(num_blocks, num_splits)
    apply_mask = (num_splits * inner * block_rows) != rows

    def x_map(c, i):
        # Clamp so the extra step of an odd split stays in bounds; its
        # contribution is fully masked to zero inside the kernel.
        return (jnp.minimum(c * inner + i, num_blocks - 1), 0)

    kernel = functools.partial(
        _gloss_kernel,
        total_rows=rows,
        block_rows=block_rows,
        apply_mask=apply_mask,
    )

    partials = pl.pallas_call(
        kernel,
        out_shape=jax.ShapeDtypeStruct((num_splits, 1), jnp.float32),
        grid_spec=pltpu.PrefetchScalarGridSpec(
            num_scalar_prefetch=0,
            grid=(num_splits, inner),
            in_specs=[pl.BlockSpec((block_rows, LANES), x_map)],
            out_specs=pl.BlockSpec((1, 1), lambda c, i: (c, 0)),
            scratch_shapes=[pltpu.VMEM((block_rows, LANES), jnp.float32)],
        ),
        compiler_params=pltpu.CompilerParams(
            dimension_semantics=("parallel", "arbitrary"),
        ),
        cost_estimate=pl.CostEstimate(
            flops=3 * n,
            transcendentals=n,
            bytes_accessed=n * itemsize + 4 * num_splits,
        ),
    )(x2d)

    # Exact mean: masked/padded elements contributed exactly 0 to the sum.
    return jnp.sum(partials) / n


if __name__ == "__main__":
    key = jax.random.PRNGKey(0)
    # Discriminator outputs in (0, 1): batch=2, seq=8, feat=128
    batch, seq, feat = 2, 8, 128
    logits_gen = jax.nn.sigmoid(
        jax.random.normal(key, (batch, seq, feat), dtype=jnp.float32)
    )

    loss = g_loss(logits_gen)
    jax.block_until_ready(loss)

    # Reference check in plain JAX (same semantics as the PyTorch module).
    ref = jnp.mean(-jnp.log(jnp.clip(logits_gen, EPSILON, 1.0)))
    assert jnp.allclose(loss, ref, rtol=1e-5, atol=1e-6), (loss, ref)

    print("KERNEL_OK")
</pallas_src>

<mosaic_0001>
module attributes {stable_mosaic.version = 11 : i64} {
  func.func @_gloss_kernel(%arg0: i32, %arg1: i32, %arg2: memref<16x128xf32, #tpu.memory_space<vmem>>, %arg3: memref<1x1xf32, #tpu.memory_space<vmem>>, %arg4: memref<16x128xf32, #tpu.memory_space<vmem>>) attributes {dimension_semantics = [#tpu.dimension_semantics<parallel>, #tpu.dimension_semantics<arbitrary>], iteration_bounds = array<i64: 1, 1>, scalar_prefetch = 0 : i64, scratch_operands = 1 : i64, tpu.core_type = #tpu.core_type<tc>, window_params = [{transform_indices = @transform_0, window_bounds = array<i64: 16, 128>}, {transform_indices = @transform_1, window_bounds = array<i64: 1, 1>}]} {
    %c0_i32 = arith.constant 0 : i32
    %0 = arith.cmpi eq, %arg1, %c0_i32 : i32
    %1 = arith.extui %0 : i1 to i32
    %c0_i32_0 = arith.constant 0 : i32
    %2 = arith.cmpi ne, %1, %c0_i32_0 : i32
    scf.if %2 {
      %cst_10 = arith.constant 0.000000e+00 : f32
      %17 = vector.broadcast %cst_10 : f32 to vector<16x128xf32>
      %c0_11 = arith.constant 0 : index
      %c0_12 = arith.constant 0 : index
      %18 = vector.load %arg4[%c0_11, %c0_12] : memref<16x128xf32, #tpu.memory_space<vmem>>, vector<16x128xf32>
      tpu.vector_store %arg4[%c0_11, %c0_12], %17 {strides = array<i32>} : memref<16x128xf32, #tpu.memory_space<vmem>>, vector<16x128xf32>,
    } else {
    }
    %c0 = arith.constant 0 : index
    %c0_1 = arith.constant 0 : index
    %3 = vector.load %arg2[%c0, %c0_1] : memref<16x128xf32, #tpu.memory_space<vmem>>, vector<16x128xf32>
    %cst = arith.constant 1.17549435E-38 : f32
    %cst_2 = arith.constant 1.000000e+00 : f32
    %4 = vector.broadcast %cst : f32 to vector<16x128xf32>
    %5 = arith.maximumf %4, %3 : vector<16x128xf32>
    %6 = vector.broadcast %cst_2 : f32 to vector<16x128xf32>
    %7 = arith.minimumf %6, %5 : vector<16x128xf32>
    %c0_3 = arith.constant 0 : index
    %c0_4 = arith.constant 0 : index
    %8 = vector.load %arg4[%c0_3, %c0_4] : memref<16x128xf32, #tpu.memory_space<vmem>>, vector<16x128xf32>
    %9 = math.log %7 : vector<16x128xf32>
    %cst_5 = arith.constant 0.000000e+00 : f32
    %10 = vector.broadcast %cst_5 : f32 to vector<16x128xf32>
    %11 = arith.subf %10, %9 : vector<16x128xf32>
    %12 = arith.addf %8, %11 : vector<16x128xf32>
    %c0_6 = arith.constant 0 : index
    %c0_7 = arith.constant 0 : index
    %13 = vector.load %arg4[%c0_6, %c0_7] : memref<16x128xf32, #tpu.memory_space<vmem>>, vector<16x128xf32>
    tpu.vector_store %arg4[%c0_6, %c0_7], %12 {strides = array<i32>} : memref<16x128xf32, #tpu.memory_space<vmem>>, vector<16x128xf32>,
    %c0_i32_8 = arith.constant 0 : i32
    %14 = arith.cmpi eq, %arg1, %c0_i32_8 : i32
    %15 = arith.extui %14 : i1 to i32
    %c0_i32_9 = arith.constant 0 : i32
    %16 = arith.cmpi ne, %15, %c0_i32_9 : i32
    scf.if %16 {
      %c0_10 = arith.constant 0 : index
      %c0_11 = arith.constant 0 : index
      %17 = vector.load %arg4[%c0_10, %c0_11] : memref<16x128xf32, #tpu.memory_space<vmem>>, vector<16x128xf32>
      %18 = vector.shape_cast %17 : vector<16x128xf32> to vector<1x16x128xf32>
      %cst_12 = arith.constant dense<0.000000e+00> : vector<1xf32>
      %19 = vector.multi_reduction <add>, %18, %cst_12 [1, 2] : vector<1x16x128xf32> to vector<1xf32>
      %20 = vector.shape_cast %19 : vector<1xf32> to vector<1x1x1xf32>
      %21 = vector.extract %20[0, 0, 0] : f32 from vector<1x1x1xf32>
      %22 = vector.broadcast %21 : f32 to vector<1x1xf32>
      %c0_13 = arith.constant 0 : index
      %c0_14 = arith.constant 0 : index
      %23 = vector.load %arg3[%c0_13, %c0_14] : memref<1x1xf32, #tpu.memory_space<vmem>>, vector<1x1xf32>
      tpu.vector_store %arg3[%c0_13, %c0_14], %22 {strides = array<i32>} : memref<1x1xf32, #tpu.memory_space<vmem>>, vector<1x1xf32>,
    } else {
    }
    return
  }
  func.func @transform_0(%arg0: i32, %arg1: i32) -> (i32, i32) {
    %c1_i32 = arith.constant 1 : i32
    %0 = arith.muli %arg0, %c1_i32 : i32
    %1 = arith.addi %0, %arg1 : i32
    %c0_i32 = arith.constant 0 : i32
    %2 = arith.minsi %1, %c0_i32 : i32
    %c0_i32_0 = arith.constant 0 : i32
    %c0_i32_1 = arith.constant 0 : i32
    return %2, %c0_i32_0 : i32, i32
  }
  func.func @transform_1(%arg0: i32, %arg1: i32) -> (i32, i32) {
    %c0_i32 = arith.constant 0 : i32
    %c0_i32_0 = arith.constant 0 : i32
    return %arg0, %c0_i32 : i32, i32
  }
}

</mosaic_0001>

<llo_original>
// kernel: tpu_custom_call.1
$region0: #{tpu_custom_call.1}
  #allocation0 [shape = 'u32[]', space=smem, size = 0x4, offset = 0x4, fixed_abs, tag = 'smem constant byte address 0x4 - core index']
  #allocation1 [shape = 'u32[144,128]{1,0:T(1,128)}', space=vmem, size = 0x12000, scoped, tag = 'internal scratch']
  #allocation2 [shape = 'f32[16,128]{1,0:T(8,128)}', space=vmem, size = 0x2000, scoped, tag = 'scratch operand']
  %s0 = inlined_call_operand.hbm [shape: f32[16,128], index: 0, kind: input, shape index: {}]
  %s1 = inlined_call_operand.hbm [shape: f32[1,1], index: 1, kind: output, shape index: {}]
  %s2 = sld [smem:[#allocation0]]
  $region26: #{tpu_custom_call.1} parent=0
    _
  %s4 = ssub.s32 1, %s2
  %s5 = scalar_select 0, %s4, %s2
  $region1: #{tpu_custom_call.1} parent=0
    #allocation3 [shape = 'u8[8192]{0}', space=vmem, size = 0x2000, scoped, tag = 'input window, operand 0, single buffered']
    #allocation4 [shape = 's32[1]{0}', space=sflag, size = 0x4, scoped, tag = 'scoped memory for tpu_custom_call.1']
    #allocation5 [shape = 's32[1]{0}', space=sflag, size = 0x4, scoped, tag = 'scoped memory for tpu_custom_call.1']
    #allocation6 [shape = 'u8[512]{0}', space=vmem, size = 0x400, scoped, tag = 'output window, operand 0, single buffered']
    %6 = vsyncpa [#allocation4], 0
    %7 = vsyncpa [#allocation5], 0
    // Predicated region
    $region2: #{tpu_custom_call.1} parent=1 // pred_check
      _
    $region3: #{tpu_custom_call.1} parent=1 // pred_check_branch
      %9 = sbr.rel (0) target = $region5
    $region4: #{tpu_custom_call.1} parent=1 // pred_region
      %s10 = sadd.s32 0, 0
      %p11 = scmp.lt.s32.totalorder %s10, 0
      %s12 = scalar_select %p11, %s10, 0
      %s13 = smul.u32 2, %s12
      %s15 = ssub.s32 256, 256
      %16 = vsyncadd [#allocation4], %s15
      %s17 = smul.addr %s13, 128
      %s18 = scalar_lea.hbm %s0, %s17
      %s19 = sshll.u32 [#allocation3], 4
      %s20 = int_to_ptr.vmem [resolvable:$true] %s19
      %25 = dma.hbm_to_vmem [thread:$0]  %s18, 256, %s20, [#allocation4], 128, 128, 8
    $region5: #{tpu_custom_call.1} parent=1 // pred_fallthru
      _
    // Predicated region
    $region6: #{tpu_custom_call.1} parent=1 // pred_check
      _
    $region7: #{tpu_custom_call.1} parent=1 // pred_check_branch
      %27 = sbr.rel (0) target = $region9
    $region8: #{tpu_custom_call.1} parent=1 // pred_region
      %28 = dma.done [#allocation4], 256
    $region9: #{tpu_custom_call.1} parent=1 // pred_fallthru
      _
    %s29 = sadd.s32 0, 0
    %p30 = scmp.lt.s32.totalorder %s29, 0
    %s31 = scalar_select %p30, %s29, 0
    %s32 = smul.u32 2, %s31
    %p33 = scmp.eq.s32.totalorder 0, 0
    // Predicated region
    $region10: #{tpu_custom_call.1} parent=1 // pred_check
      %p34 = pneg %p33
    $region11: #{tpu_custom_call.1} parent=1 // pred_check_branch
      %36 = sbr.rel (%p34) target = $region13
    $region12: #{tpu_custom_call.1} parent=1 // pred_region
      %37 = vst [vmem:[#allocation2] sm:$0xff] 0.0
      %38 = vst [vmem:[#allocation2 + $0x8] sm:$0xff] 0.0
    $region13: #{tpu_custom_call.1} parent=1 // pred_fallthru
      _
    %v39 = vld [vmem:[#allocation3] sm:$0xff]
    %v40 = vld [vmem:[#allocation3 + $0x8] sm:$0xff]
    %v41 = vmax.f32 %v39, 1.1754944e-38
    %v42 = vmax.f32 %v40, 1.1754944e-38
    %v43 = vmin.f32 %v41, 1.0
    %v44 = vmin.f32 %v42, 1.0
    %v45 = vld [vmem:[#allocation2] sm:$0xff]
    %v46 = vld [vmem:[#allocation2 + $0x8] sm:$0xff]
    %v47 = vlog2.pop %v43
    %v48 = vmul.f32 %v47, 0.6931472
    %v49 = vlog2.pop %v44
    %v50 = vmul.f32 %v49, 0.6931472
    %v51 = vsub.f32 0.0, %v48
    %v52 = vsub.f32 0.0, %v50
    %v53 = vadd.f32 %v45, %v51
    %v54 = vadd.f32 %v46, %v52
    %55 = vst [vmem:[#allocation2] sm:$0xff] %v53
    %56 = vst [vmem:[#allocation2 + $0x8] sm:$0xff] %v54
    // Predicated region
    $region14: #{tpu_custom_call.1} parent=1 // pred_check
      %p57 = pneg %p33
    $region15: #{tpu_custom_call.1} parent=1 // pred_check_branch
      %59 = sbr.rel (%p57) target = $region17
    $region16: #{tpu_custom_call.1} parent=1 // pred_region
      %v60 = vld [vmem:[#allocation2] sm:$0xff]
      %v61 = vld [vmem:[#allocation2 + $0x8] sm:$0xff]
      %v62 = vadd.f32 %v60, %v61
      %63 = vadd.xlane.f32.xlu0 %v62
      %v64 = vpop.xlane.xlu0 %63
      %v65 = vrot.slane %v64, 4
      %v66 = vadd.f32 %v64, %v65
      %v67 = vrot.slane %v66, 2
      %v68 = vadd.f32 %v66, %v67
      %v69 = vrot.slane %v68, 1
      %v70 = vadd.f32 %v68, %v69
      %s71 = vtos %v70
      %v72 = vstv %s71
      %vm73 = vcmask 0
      %74 = vst.msk [vmem:[#allocation6] sm:$0x1] %vm73, %v72
    $region17: #{tpu_custom_call.1} parent=1 // pred_fallthru
      _
    // Predicated region
    $region18: #{tpu_custom_call.1} parent=1 // pred_check
      _
    $region19: #{tpu_custom_call.1} parent=1 // pred_check_branch
      %76 = sbr.rel (0) target = $region21
    $region20: #{tpu_custom_call.1} parent=1 // pred_region
      %s78 = ssub.s32 16, 16
      %79 = vsyncadd [#allocation5], %s78
      %s81 = sshll.u32 [#allocation6], 4
      %s82 = int_to_ptr.vmem [resolvable:$true] %s81
      %84 = dma.vmem_to_hbm [thread:$0]  %s82, 16, %s1, [#allocation5]
    $region21: #{tpu_custom_call.1} parent=1 // pred_fallthru
      _
    // Predicated region
    $region22: #{tpu_custom_call.1} parent=1 // pred_check
      _
    $region23: #{tpu_custom_call.1} parent=1 // pred_check_branch
      %86 = sbr.rel (0) target = $region25
    $region24: #{tpu_custom_call.1} parent=1 // pred_region
      %87 = dma.done [#allocation5], 16
    $region25: #{tpu_custom_call.1} parent=1 // pred_fallthru
      _
    %88 = vsyncpa [#allocation4], 1
    %89 = vsyncpa [#allocation5], 1

</llo_original>
